<compile_context>
chip_gen: v7x
topology: tpu7x:2x2x1
jax: 0.10.0
libtpu: 0.0.40
codegen_flags: <defaults>
</compile_context>

<pallas_src>
import jax
import jax.numpy as jnp
from jax.experimental import pallas as pl
from jax.experimental.pallas import tpu as pltpu


_SMALL_PATH_BYTES = 4 << 20  # below this total footprint, use the single-step path
_VMEM_LIMIT_BYTES = 32 << 20  # fits v5e/v6e/v7x; >> 10 MiB worst-case working set


def _round_up(x, m):
    return ((x + m - 1) // m) * m


def _choose_tile(dim, candidates, align):
    """Pick a tile size (multiple of `align`) for `dim`.

    If the dim fits inside the largest candidate, use one aligned full tile.
    Otherwise pick the largest candidate whose padding waste is <= dim/8,
    falling back to the smallest candidate (waste then bounded by it).
    """
    if dim <= candidates[0]:
        return min(candidates[0], _round_up(dim, align))
    for c in candidates:
        if _round_up(dim, c) - dim <= dim // 8:
            return c
    return candidates[-1]


def _small_cost_estimate(B, M, K, N, itemsize):
    return pl.CostEstimate(
        flops=2 * B * M * K * N + B * M * N,  # matmul + final x2 scale
        transcendentals=0,
        bytes_accessed=itemsize * (B * M * K + B * K * N + B * M * N),
    )


def _tiled_cost_estimate(B, M, K, N, itemsize, m_tiles, n_tiles):
    # A is streamed once per N-tile, B once per M-tile.
    return pl.CostEstimate(
        flops=2 * B * M * K * N + B * M * N,
        transcendentals=0,
        bytes_accessed=itemsize
        * (B * M * K * n_tiles + B * K * N * m_tiles + B * M * N),
    )


# ----------------------------------------------------------------------------
# Small-shape path: one grid step, all batches at once (no per-step overhead).
# ----------------------------------------------------------------------------
def _matmul_double_small_kernel(a_ref, b_ref, o_ref):
    # a_ref: (B, M, K), b_ref: (B, K, N), o_ref: (B, M, N) -- all resident in VMEM.
    acc = jnp.einsum(
        "bmk,bkn->bmn", a_ref[...], b_ref[...],
        preferred_element_type=jnp.float32,
    )
    # a @ (b + b) == 2 * (a @ b): scale the small output, not the (K, N) operand.
    o_ref[...] = (2.0 * acc).astype(o_ref.dtype)


def _matmul_double_small(a, b, out_dtype):
    B, M, K = a.shape
    _, _, N = b.shape
    vmem_spec = pl.BlockSpec(memory_space=pltpu.MemorySpace.VMEM)
    return pl.pallas_call(
        _matmul_double_small_kernel,
        out_shape=jax.ShapeDtypeStruct((B, M, N), out_dtype),
        in_specs=[vmem_spec, vmem_spec],
        out_specs=vmem_spec,
        cost_estimate=_small_cost_estimate(B, M, K, N, a.dtype.itemsize),
    )(a, b)


# ----------------------------------------------------------------------------
# General path: batched, M/N/K-tiled matmul. Output block is resident across
# the K ("arbitrary", last) grid axis, so for f32 outputs we accumulate
# directly into o_ref; a scratch-accumulator variant covers other out dtypes.
# ----------------------------------------------------------------------------
def _matmul_double_tiled_kernel_f32out(a_ref, b_ref, o_ref):
    # Batch dim is squeezed away: a_ref (tm, tk), b_ref (tk, tn), o_ref (tm, tn).
    k = pl.program_id(3)

    @pl.when(k == 0)
    def _():
        o_ref[...] = jnp.zeros_like(o_ref)

    o_ref[...] += jnp.dot(
        a_ref[...], b_ref[...], preferred_element_type=jnp.float32
    )

    @pl.when(k == pl.num_programs(3) - 1)
    def _():
        # Fold the (b + b) into a x2 on the (tm, tn) result, not the (K, N) operand.
        o_ref[...] = 2.0 * o_ref[...]


def _matmul_double_tiled_kernel_acc(a_ref, b_ref, o_ref, acc_ref):
    k = pl.program_id(3)

    @pl.when(k == 0)
    def _():
        acc_ref[...] = jnp.zeros_like(acc_ref)

    acc_ref[...] += jnp.dot(
        a_ref[...], b_ref[...], preferred_element_type=jnp.float32
    )

    @pl.when(k == pl.num_programs(3) - 1)
    def _():
        o_ref[...] = (2.0 * acc_ref[...]).astype(o_ref.dtype)


def _matmul_double_tiled(a, b, out_dtype):
    B, M, K = a.shape
    _, _, N = b.shape

    # 512x512 output tiles -> 128 FLOP/byte per inner K-step (MXU-bound on every
    # generation); tk up to 1024 only changes per-step DMA size, not intensity.
    tm = _choose_tile(M, (512, 256, 128), 8)
    tn = _choose_tile(N, (512, 256, 128), 128)
    tk = _choose_tile(K, (1024, 512, 256, 128), 128)

    # v7x megacore: guarantee at least one "parallel" grid axis has extent >= 2
    # so both TensorCores get work when B == 1 and the M/N grid collapses.
    if B == 1 and M <= tm and N <= tn:
        if tn > 128:
            tn //= 2
        elif tm >= 16:
            tm = _round_up(tm // 2, 8)

    # Pad ragged dims up to tile multiples (zeros in K contribute nothing; extra
    # M rows / N cols are sliced off below). Keeps tiles MXU-shaped and avoids
    # the full-extent-block VMEM hazard on v7x (64 MiB) / v5e (16 MiB scoped).
    Mp, Kp, Np = _round_up(M, tm), _round_up(K, tk), _round_up(N, tn)
    if (Mp, Kp) != (M, K):
        a = jnp.pad(a, ((0, 0), (0, Mp - M), (0, Kp - K)))
    if (Kp, Np) != (K, N):
        b = jnp.pad(b, ((0, 0), (0, Kp - K), (0, Np - N)))

    grid = (B, Mp // tm, Np // tn, Kp // tk)

    use_acc_scratch = out_dtype != jnp.float32
    kernel = (_matmul_double_tiled_kernel_acc if use_acc_scratch
              else _matmul_double_tiled_kernel_f32out)
    scratch_shapes = (
        [pltpu.VMEM((tm, tn), jnp.float32)] if use_acc_scratch else []
    )

    out = pl.pallas_call(
        kernel,
        out_shape=jax.ShapeDtypeStruct((B, Mp, Np), out_dtype),
        grid_spec=pltpu.PrefetchScalarGridSpec(
            num_scalar_prefetch=0,
            grid=grid,
            in_specs=[
                pl.BlockSpec((pl.Squeezed(), tm, tk),
                             lambda bb, i, j, kk: (bb, i, kk)),
                pl.BlockSpec((pl.Squeezed(), tk, tn),
                             lambda bb, i, j, kk: (bb, kk, j)),
            ],
            out_specs=pl.BlockSpec((pl.Squeezed(), tm, tn),
                                   lambda bb, i, j, kk: (bb, i, j)),
            scratch_shapes=scratch_shapes,
        ),
        compiler_params=pltpu.CompilerParams(
            # B / M / N parallel (megacore sharding), K reduction -> arbitrary, last.
            dimension_semantics=("parallel", "parallel", "parallel", "arbitrary"),
            vmem_limit_bytes=_VMEM_LIMIT_BYTES,
        ),
        cost_estimate=_tiled_cost_estimate(
            B, Mp, Kp, Np, a.dtype.itemsize, Mp // tm, Np // tn
        ),
    )(a, b)

    if (Mp, Np) != (M, N):
        out = out[:, :M, :N]
    return out


def matmul_double(a, b, *, use_bf16_inputs=False):
    """Computes a.matmul(b + b) for a: [B, M, K] (or [M, K]), b: [B, K, N] (or [K, N])."""
    a = jnp.asarray(a)
    b = jnp.asarray(b)

    squeeze_2d = False
    if a.ndim == 2 and b.ndim == 2:
        a, b = a[None], b[None]
        squeeze_2d = True
    assert a.ndim == 3 and b.ndim == 3, "expected 2-D or batched 3-D operands"
    # TODO(synk): full torch.matmul batch broadcasting (e.g. 3-D @ 2-D, >3-D) not implemented.
    B, M, K = a.shape
    B2, K2, N = b.shape
    assert B == B2 and K == K2, "shape mismatch"

    out_dtype = jnp.result_type(a.dtype, b.dtype)
    if use_bf16_inputs:
        # Opt-in fast path for v6e/v7x: halves HBM traffic and hits the bf16 MXU
        # (f32 accumulation is kept inside the kernel). Changes numerics slightly,
        # so it is off by default to preserve exact f32 parity with the module.
        a = a.astype(jnp.bfloat16)
        b = b.astype(jnp.bfloat16)

    total_bytes = (B * M * K + B * K * N + B * M * N) * a.dtype.itemsize
    if total_bytes <= _SMALL_PATH_BYTES:
        out = _matmul_double_small(a, b, out_dtype)
    else:
        out = _matmul_double_tiled(a, b, out_dtype)

    if squeeze_2d:
        out = out[0]
    return out


def _check(out, ref, tol, name):
    err = float(jnp.max(jnp.abs(out - ref)))
    scale = float(jnp.max(jnp.abs(ref))) + 1e-6
    assert err / scale < tol, f"{name} mismatch: rel_err={err / scale:.3e}"


if __name__ == "__main__":
    key = jax.random.PRNGKey(0)
    k1, k2, k3, k4, k5, k6 = jax.random.split(key, 6)

    # 1) Small shapes matching the torch_glow test -> single-step VMEM path.
    B, M, K, N = 2, 8, 32, 16
    a = jax.random.normal(k1, (B, M, K), dtype=jnp.float32)
    b = jax.random.normal(k2, (B, K, N), dtype=jnp.float32)
    out = jax.block_until_ready(matmul_double(a, b))
    _check(out, jnp.matmul(a, b + b), 1e-2, "small-path")

    # 2) Tile-aligned shapes large enough to hit the M/N/K-tiled MXU pipeline.
    B2, M2, K2, N2 = 2, 512, 512, 512
    a2 = jax.random.normal(k3, (B2, M2, K2), dtype=jnp.float32)
    b2 = jax.random.normal(k4, (B2, K2, N2), dtype=jnp.float32)
    out2 = jax.block_until_ready(matmul_double(a2, b2))
    _check(out2, jnp.matmul(a2, b2 + b2), 1e-2, "tiled-path")

    # 3) Ragged shapes forced through the tiled path to exercise the padding
    #    fallback and the v7x megacore tile-halving logic.
    B3, M3, K3, N3 = 1, 200, 320, 200
    a3 = jax.random.normal(k5, (B3, M3, K3), dtype=jnp.float32)
    b3 = jax.random.normal(k6, (B3, K3, N3), dtype=jnp.float32)
    out3 = jax.block_until_ready(_matmul_double_tiled(a3, b3, jnp.float32))
    _check(out3, jnp.matmul(a3, b3 + b3), 1e-2, "ragged-tiled-path")

    print("KERNEL_OK")
</pallas_src>

<mosaic_0001>
module attributes {stable_mosaic.version = 11 : i64} {
  func.func @_matmul_double_small_kernel(%arg0: memref<2x8x32xf32, #tpu.memory_space<vmem>>, %arg1: memref<2x32x16xf32, #tpu.memory_space<vmem>>, %arg2: memref<2x8x16xf32, #tpu.memory_space<vmem>>) attributes {dimension_semantics = [], scalar_prefetch = 0 : i64, scratch_operands = 0 : i64, tpu.core_type = #tpu.core_type<tc>} {
    %c0 = arith.constant 0 : index
    %c0_0 = arith.constant 0 : index
    %c0_1 = arith.constant 0 : index
    %0 = vector.load %arg0[%c0, %c0_0, %c0_1] : memref<2x8x32xf32, #tpu.memory_space<vmem>>, vector<2x8x32xf32>
    %c0_2 = arith.constant 0 : index
    %c0_3 = arith.constant 0 : index
    %c0_4 = arith.constant 0 : index
    %1 = vector.load %arg1[%c0_2, %c0_3, %c0_4] : memref<2x32x16xf32, #tpu.memory_space<vmem>>, vector<2x32x16xf32>
    "tpu.trace_start"() <{level = 10 : i32, message = "bmk,bkn->bmn"}> : () -> ()
    %cst = arith.constant dense<0.000000e+00> : vector<2x8x16xf32>
    %2 = tpu.matmul %0, %1, %cst {dimension_numbers = #tpu.dot_dimension_numbers<[2], [1], [1], [2], [0, 0, 0, 1, 1, 2], [0], [0]>} : vector<2x8x32xf32>, vector<2x32x16xf32>, vector<2x8x16xf32> -> vector<2x8x16xf32>
    "tpu.trace_stop"() : () -> ()
    %cst_5 = arith.constant 2.000000e+00 : f32
    %3 = vector.broadcast %cst_5 : f32 to vector<2x8x16xf32>
    %4 = arith.mulf %3, %2 : vector<2x8x16xf32>
    %c0_6 = arith.constant 0 : index
    %c0_7 = arith.constant 0 : index
    %c0_8 = arith.constant 0 : index
    %5 = vector.load %arg2[%c0_6, %c0_7, %c0_8] : memref<2x8x16xf32, #tpu.memory_space<vmem>>, vector<2x8x16xf32>
    tpu.vector_store %arg2[%c0_6, %c0_7, %c0_8], %4 {strides = array<i32>} : memref<2x8x16xf32, #tpu.memory_space<vmem>>, vector<2x8x16xf32>,
    return
  }
}

</mosaic_0001>

<llo_original>
// kernel: tpu_custom_call.1
$region0: #{tpu_custom_call.1}
  #allocation0 [shape = 'u32[]', space=smem, size = 0x4, offset = 0x4, fixed_abs, tag = 'smem constant byte address 0x4 - core index']
  #allocation1 [shape = 'u32[144,128]{1,0:T(1,128)}', space=vmem, size = 0x12000, scoped, tag = 'internal scratch']
  %s0 = inlined_call_operand.vmem [shape: f32[2,8,32], index: 0, kind: input, shape index: {}]
  %s1 = inlined_call_operand.vmem [shape: f32[2,32,16], index: 1, kind: input, shape index: {}]
  %s2 = inlined_call_operand.hbm [shape: f32[2,8,16], index: 2, kind: output, shape index: {}]
  %s3 = sld [smem:[#allocation0]]
  $region18: #{tpu_custom_call.1} parent=0
    _
  %s5 = ssub.s32 1, %s3
  %s6 = scalar_select 0, %s5, %s3
  $region1: #{tpu_custom_call.1} parent=0
    #allocation2 [shape = 'u8[8192]{0}', space=vmem, size = 0x2000, scoped, tag = 'output window, operand 0, single buffered']
    #allocation3 [shape = 's32[1]{0}', space=sflag, size = 0x4, scoped, tag = 'scoped memory for tpu_custom_call.1']
    %7 = vsyncpa [#allocation3], 0
    // Predicated region
    $region2: #{tpu_custom_call.1} parent=1 // pred_check
      _
    $region3: #{tpu_custom_call.1} parent=1 // pred_check_branch
      %9 = sbr.rel (0) target = $region5
    $region4: #{tpu_custom_call.1} parent=1 // pred_region
      _
    $region5: #{tpu_custom_call.1} parent=1 // pred_fallthru
      _
    // Predicated region
    $region6: #{tpu_custom_call.1} parent=1 // pred_check
      _
    $region7: #{tpu_custom_call.1} parent=1 // pred_check_branch
      %11 = sbr.rel (0) target = $region9
    $region8: #{tpu_custom_call.1} parent=1 // pred_region
      _
    $region9: #{tpu_custom_call.1} parent=1 // pred_fallthru
      _
    %v12 = vld [vmem:[%s0] sm:$0xff]
    %v13 = vld [vmem:[%s0 + $0x8] sm:$0xff]
    %v14 = vld [vmem:[%s1] sm:$0xff]
    %v15 = vld [vmem:[%s1 + $0x8] sm:$0xff]
    %v16 = vld [vmem:[%s1 + $0x10] sm:$0xff]
    %v17 = vld [vmem:[%s1 + $0x18] sm:$0xff]
    %v18 = vld [vmem:[%s1 + $0x20] sm:$0xff]
    %v19 = vld [vmem:[%s1 + $0x28] sm:$0xff]
    %v20 = vld [vmem:[%s1 + $0x30] sm:$0xff]
    %v21 = vld [vmem:[%s1 + $0x38] sm:$0xff]
    %vm22 = vcmask 261120
    %v24 = vsel %vm22, %v12, 0
    %26 = vmatprep.subr.mxu0 0.0
    %27 = vmatpush1.msra.mxu0 %v14
    %28 = vmatprep.subr.mxu0 0.0
    %29 = vmatpush1.msra.mxu0 %v15
    %30 = vmatprep.subr.mxu0 0.0
    %31 = vmatpush1.msra.mxu0 %v16
    %32 = vmatprep.subr.mxu0 0.0
    %33 = vmatpush1.msra.mxu0 %v17
    %34 = vmatprep.subr.mxu0 0.0
    %35 = vmatpush1.msra.mxu0 0.0
    %36 = vmatprep.subr.mxu0 0.0
    %37 = vmatpush1.msra.mxu0 0.0
    %38 = vmatprep.subr.mxu0 0.0
    %39 = vmatpush1.msra.mxu0 0.0
    %40 = vmatprep.subr.mxu0 0.0
    %41 = vmatpush1.msra.mxu0 0.0
    %42 = vmatprep.subr.mxu0 0.0
    %43 = vmatpush1.msra.mxu0 0.0
    %44 = vmatprep.subr.mxu0 0.0
    %45 = vmatpush1.msra.mxu0 0.0
    %46 = vmatprep.subr.mxu0 0.0
    %47 = vmatpush1.msra.mxu0 0.0
    %48 = vmatprep.subr.mxu0 0.0
    %49 = vmatpush1.msra.mxu0 0.0
    %50 = vmatprep.subr.mxu0 0.0
    %51 = vmatpush1.msra.mxu0 0.0
    %52 = vmatprep.subr.mxu0 0.0
    %53 = vmatpush1.msra.mxu0 0.0
    %54 = vmatprep.subr.mxu0 0.0
    %55 = vmatpush1.msra.mxu0 0.0
    %56 = vmatprep.subr.mxu0 0.0
    %57 = vmatpush1.msra.mxu0 0.0
    %58 = vmatprep.subr.mxu0 0.0
    %59 = vmatpush1.msra.mxu0 0.0
    %60 = vmatprep.subr.mxu0 0.0
    %61 = vmatpush1.msra.mxu0 0.0
    %62 = vmatprep.subr.mxu0 0.0
    %63 = vmatpush1.msra.mxu0 0.0
    %64 = vmatprep.subr.mxu0 0.0
    %65 = vmatpush1.msra.mxu0 0.0
    %66 = vmatprep.subr.mxu0 0.0
    %67 = vmatpush1.msra.mxu0 0.0
    %68 = vmatprep.subr.mxu0 0.0
    %69 = vmatpush1.msra.mxu0 0.0
    %70 = vmatprep.subr.mxu0 0.0
    %71 = vmatpush1.msra.mxu0 0.0
    %72 = vmatprep.subr.mxu0 0.0
    %73 = vmatpush1.msra.mxu0 0.0
    %74 = vmatprep.subr.mxu0 0.0
    %75 = vmatpush1.msra.mxu0 0.0
    %76 = vmatprep.subr.mxu0 0.0
    %77 = vmatpush1.msra.mxu0 0.0
    %78 = vmatprep.subr.mxu0 0.0
    %79 = vmatpush1.msra.mxu0 0.0
    %80 = vmatprep.subr.mxu0 0.0
    %81 = vmatpush1.msra.mxu0 0.0
    %82 = vmatprep.subr.mxu0 0.0
    %83 = vmatpush1.msra.mxu0 0.0
    %84 = vmatprep.subr.mxu0 0.0
    %85 = vmatpush1.msra.mxu0 0.0
    %86 = vmatprep.subr.mxu0 0.0
    %87 = vmatpush1.msra.mxu0 0.0
    %88 = vmatprep.subr.mxu0 0.0
    %89 = vmatpush1.msra.mxu0 0.0
    %90 = vmatprep.mubr.f32.mxu0 0.0
    %91 = vmatmul.mubr.f32.gmra.mrb[0].mxu0 %v24
    %v92 = vpop.f32.mrb[0].mxu0
    %v93 = vadd.f32 0.0, %v92
    %v94 = vpop.f32.mrb[0].mxu0
    %95 = vdwg.mxu0
    %v97 = vsel %vm22, %v13, 0
    %99 = vmatprep.subr.mxu0 0.0
    %100 = vmatpush1.msra.mxu0 %v18
    %101 = vmatprep.subr.mxu0 0.0
    %102 = vmatpush1.msra.mxu0 %v19
    %103 = vmatprep.subr.mxu0 0.0
    %104 = vmatpush1.msra.mxu0 %v20
    %105 = vmatprep.subr.mxu0 0.0
    %106 = vmatpush1.msra.mxu0 %v21
    %107 = vmatprep.subr.mxu0 0.0
    %108 = vmatpush1.msra.mxu0 0.0
    %109 = vmatprep.subr.mxu0 0.0
    %110 = vmatpush1.msra.mxu0 0.0
    %111 = vmatprep.subr.mxu0 0.0
    %112 = vmatpush1.msra.mxu0 0.0
    %113 = vmatprep.subr.mxu0 0.0
    %114 = vmatpush1.msra.mxu0 0.0
    %115 = vmatprep.subr.mxu0 0.0
    %116 = vmatpush1.msra.mxu0 0.0
    %117 = vmatprep.subr.mxu0 0.0
    %118 = vmatpush1.msra.mxu0 0.0
    %119 = vmatprep.subr.mxu0 0.0
    %120 = vmatpush1.msra.mxu0 0.0
    %121 = vmatprep.subr.mxu0 0.0
    %122 = vmatpush1.msra.mxu0 0.0
    %123 = vmatprep.subr.mxu0 0.0
    %124 = vmatpush1.msra.mxu0 0.0
    %125 = vmatprep.subr.mxu0 0.0
    %126 = vmatpush1.msra.mxu0 0.0
    %127 = vmatprep.subr.mxu0 0.0
    %128 = vmatpush1.msra.mxu0 0.0
    %129 = vmatprep.subr.mxu0 0.0
    %130 = vmatpush1.msra.mxu0 0.0
    %131 = vmatprep.subr.mxu0 0.0
    %132 = vmatpush1.msra.mxu0 0.0
    %133 = vmatprep.subr.mxu0 0.0
    %134 = vmatpush1.msra.mxu0 0.0
    %135 = vmatprep.subr.mxu0 0.0
    %136 = vmatpush1.msra.mxu0 0.0
    %137 = vmatprep.subr.mxu0 0.0
    %138 = vmatpush1.msra.mxu0 0.0
    %139 = vmatprep.subr.mxu0 0.0
    %140 = vmatpush1.msra.mxu0 0.0
    %141 = vmatprep.subr.mxu0 0.0
    %142 = vmatpush1.msra.mxu0 0.0
    %143 = vmatprep.subr.mxu0 0.0
    %144 = vmatpush1.msra.mxu0 0.0
    %145 = vmatprep.subr.mxu0 0.0
    %146 = vmatpush1.msra.mxu0 0.0
    %147 = vmatprep.subr.mxu0 0.0
    %148 = vmatpush1.msra.mxu0 0.0
    %149 = vmatprep.subr.mxu0 0.0
    %150 = vmatpush1.msra.mxu0 0.0
    %151 = vmatprep.subr.mxu0 0.0
    %152 = vmatpush1.msra.mxu0 0.0
    %153 = vmatprep.subr.mxu0 0.0
    %154 = vmatpush1.msra.mxu0 0.0
    %155 = vmatprep.subr.mxu0 0.0
    %156 = vmatpush1.msra.mxu0 0.0
    %157 = vmatprep.subr.mxu0 0.0
    %158 = vmatpush1.msra.mxu0 0.0
    %159 = vmatprep.subr.mxu0 0.0
    %160 = vmatpush1.msra.mxu0 0.0
    %161 = vmatprep.subr.mxu0 0.0
    %162 = vmatpush1.msra.mxu0 0.0
    %163 = vmatprep.mubr.f32.mxu0 0.0
    %164 = vmatmul.mubr.f32.gmra.mrb[0].mxu0 %v97
    %v165 = vpop.f32.mrb[0].mxu0
    %v166 = vadd.f32 0.0, %v165
    %v167 = vpop.f32.mrb[0].mxu0
    %168 = vdwg.mxu0
    %v169 = vmul.f32 %v93, 2.0
    %v170 = vmul.f32 %v166, 2.0
    %vm171 = vcmask 130048
    %172 = vst.msk [vmem:[#allocation2] sm:$0xff] %vm171, %v169
    %173 = vst.msk [vmem:[#allocation2 + $0x8] sm:$0xff] %vm171, %v170
    // Predicated region
    $region10: #{tpu_custom_call.1} parent=1 // pred_check
      _
    $region11: #{tpu_custom_call.1} parent=1 // pred_check_branch
      %175 = sbr.rel (0) target = $region13
    $region12: #{tpu_custom_call.1} parent=1 // pred_region
      %s177 = ssub.s32 256, 256
      %178 = vsyncadd [#allocation3], %s177
      %s179 = sshll.u32 [#allocation2], 4
      %s180 = int_to_ptr.vmem [resolvable:$true] %s179
      %185 = dma.vmem_to_hbm [thread:$0]  %s180, 256, %s2, [#allocation3], 128, 128, 8
    $region13: #{tpu_custom_call.1} parent=1 // pred_fallthru
      _
    // Predicated region
    $region14: #{tpu_custom_call.1} parent=1 // pred_check
      _
    $region15: #{tpu_custom_call.1} parent=1 // pred_check_branch
      %187 = sbr.rel (0) target = $region17
    $region16: #{tpu_custom_call.1} parent=1 // pred_region
      %188 = dma.done [#allocation3], 256
    $region17: #{tpu_custom_call.1} parent=1 // pred_fallthru
      _
    %189 = vsyncpa [#allocation3], 1

</llo_original>
